<compile_context>
chip_gen: v7x
topology: tpu7x:2x2x1
jax: 0.10.0
libtpu: 0.0.40
codegen_flags: <defaults>
</compile_context>

<pallas_src>
import math
import functools

import jax
import jax.numpy as jnp
from jax import lax
from jax.experimental import pallas as pl
from jax.experimental.pallas import tpu as pltpu

LN_EPS = 1e-12                 # BERT default layer_norm_eps
INV_SQRT2 = 1.0 / math.sqrt(2.0)


def _round_up(x, m):
    return (x + m - 1) // m * m


def _vmem_cap_bytes():
    """Generation-gated scoped-VMEM cap.

    ~96 MiB on 128-MiB-VMEM parts (v5e/v6e), 48 MiB on 64-MiB parts (v7x).
    Falls back to the universally-safe 48 MiB if the query is unavailable.
    """
    try:
        vmem = pltpu.get_tpu_info().vmem_capacity_bytes
        if vmem >= (100 << 20):
            return 96 << 20
        return 48 << 20
    except Exception:
        return 48 << 20


def _vmem_limit(per_step_bytes, cap):
    # double-buffered pipeline + headroom, clamped to the generation cap.
    return int(min(max(2 * per_step_bytes + (8 << 20), 32 << 20), cap))


# --------------------------------------------------------------------------
# pass 1: dense(H->H) + GELU + LayerNorm, tiled over M rows
# --------------------------------------------------------------------------
def _transform_kernel(x_ref, w1_ref, b1_ref, g_ref, beta_ref, t_ref):
    # bf16 (or f32) inputs, f32 MXU accumulation.
    h = jnp.dot(x_ref[...], w1_ref[...],
                preferred_element_type=jnp.float32) + b1_ref[...]
    # exact (erf-based) GELU, matching torch.nn.functional.gelu default
    h = 0.5 * h * (1.0 + lax.erf(h * INV_SQRT2))
    mu = jnp.mean(h, axis=-1, keepdims=True)
    var = jnp.mean((h - mu) * (h - mu), axis=-1, keepdims=True)
    h = (h - mu) * lax.rsqrt(var + LN_EPS)
    t_ref[...] = (h * g_ref[...] + beta_ref[...]).astype(t_ref.dtype)


# --------------------------------------------------------------------------
# pass 2: decoder  (M,H) @ (H,V) + bias  on a 2-D (row, vocab) grid
# --------------------------------------------------------------------------
def _decoder_kernel(t_ref, w2_ref, b2_ref, o_ref):
    logits = jnp.dot(t_ref[...], w2_ref[...],
                     preferred_element_type=jnp.float32) + b2_ref[...]
    o_ref[...] = logits.astype(o_ref.dtype)


# --------------------------------------------------------------------------
# jitted forward (weights are pre-cast / pre-padded by make_bert_mlm_head)
# --------------------------------------------------------------------------
@functools.partial(
    jax.jit,
    static_argnames=("tm", "tn", "vocab", "logits_dtype", "vmem_cap"))
def _mlm_head_fwd(sequence_output, w1, b1, gamma, beta, w2, b2, *,
                  tm, tn, vocab, logits_dtype, vmem_cap):
    B, S, H = sequence_output.shape
    M = B * S
    V = vocab
    Vp = w2.shape[1]

    mm_dtype = w2.dtype                       # decoder matmul input dtype
    p1_dtype = w1.dtype                       # transform matmul input dtype
    t_item = jnp.dtype(mm_dtype).itemsize
    p1_item = jnp.dtype(p1_dtype).itemsize
    o_item = jnp.dtype(logits_dtype).itemsize

    # Effective tile sizes (clamped for tiny inputs) and padded extents.
    tm_eff = min(tm, _round_up(M, 8))
    tn_eff = min(tn, _round_up(V, 128))
    Mp = _round_up(M, tm_eff)
    assert Vp == _round_up(V, tn_eff), "prepared decoder weight padding mismatch"

    x = sequence_output.reshape(M, H).astype(p1_dtype)
    if Mp != M:
        x = jnp.pad(x, ((0, Mp - M), (0, 0)))

    # ---------------- pass 1: transform ----------------
    xform_step_bytes = (tm_eff * H * p1_item + H * H * p1_item + 3 * H * 4
                        + tm_eff * H * t_item)
    t = pl.pallas_call(
        _transform_kernel,
        out_shape=jax.ShapeDtypeStruct((Mp, H), mm_dtype),
        grid_spec=pltpu.PrefetchScalarGridSpec(
            num_scalar_prefetch=0,
            grid=(Mp // tm_eff,),
            in_specs=[
                pl.BlockSpec((tm_eff, H), lambda i: (i, 0)),  # x rows
                pl.BlockSpec((H, H), lambda i: (0, 0)),       # dense weight
                pl.BlockSpec((1, H), lambda i: (0, 0)),       # dense bias
                pl.BlockSpec((1, H), lambda i: (0, 0)),       # LN gamma
                pl.BlockSpec((1, H), lambda i: (0, 0)),       # LN beta
            ],
            out_specs=pl.BlockSpec((tm_eff, H), lambda i: (i, 0)),
        ),
        compiler_params=pltpu.CompilerParams(
            dimension_semantics=("parallel",),
            vmem_limit_bytes=_vmem_limit(xform_step_bytes, vmem_cap)),
        cost_estimate=pl.CostEstimate(
            flops=2 * Mp * H * H + 10 * Mp * H,
            transcendentals=Mp * H,
            bytes_accessed=Mp * H * p1_item + H * H * p1_item + 3 * H * 4
            + Mp * H * t_item),
    )(x, w1, b1, gamma, beta)

    # ---------------- pass 2: decoder ----------------
    n_row_tiles = Mp // tm_eff
    n_col_tiles = Vp // tn_eff
    dec_step_bytes = (tm_eff * H * t_item + H * tn_eff * t_item
                      + tn_eff * 4 + tm_eff * tn_eff * o_item)
    out = pl.pallas_call(
        _decoder_kernel,
        out_shape=jax.ShapeDtypeStruct((Mp, Vp), logits_dtype),
        grid_spec=pltpu.PrefetchScalarGridSpec(
            num_scalar_prefetch=0,
            grid=(n_row_tiles, n_col_tiles),
            in_specs=[
                pl.BlockSpec((tm_eff, H), lambda i, j: (i, 0)),   # transform out
                pl.BlockSpec((H, tn_eff), lambda i, j: (0, j)),   # decoder weight
                pl.BlockSpec((1, tn_eff), lambda i, j: (0, j)),   # decoder bias
            ],
            out_specs=pl.BlockSpec((tm_eff, tn_eff), lambda i, j: (i, j)),
        ),
        compiler_params=pltpu.CompilerParams(
            dimension_semantics=("parallel", "parallel"),
            vmem_limit_bytes=_vmem_limit(dec_step_bytes, vmem_cap)),
        cost_estimate=pl.CostEstimate(
            flops=2 * Mp * H * Vp,
            transcendentals=0,
            # Truthful re-read accounting: t re-read per vocab tile, w2 (and
            # bias) re-read per row tile, plus the logits writeback.
            bytes_accessed=(n_col_tiles * Mp * H * t_item
                            + n_row_tiles * H * Vp * t_item
                            + n_row_tiles * Vp * 4
                            + Mp * Vp * o_item)),
    )(t, w2, b2)

    return out[:M, :V].reshape(B, S, V)


# --------------------------------------------------------------------------
# factory: prepare (cast + pad) weights once, return a jitted forward
# --------------------------------------------------------------------------
def make_bert_mlm_head(params, *, tm=1024, tn=1024,
                       matmul_dtype=jnp.bfloat16,
                       logits_dtype=jnp.float32):
    """Returns forward(sequence_output) -> (B, S, V) prediction scores.

    The decoder-weight cast to `matmul_dtype` and the vocab padding are done
    ONCE here (not per call) — at real BERT sizes that weight is 45-90 MiB and
    re-materializing it every call costs more HBM traffic than all of pass 1.
    """
    H = params["dense_w"].shape[0]
    V = params["decoder_w"].shape[1]
    tn_eff = min(tn, _round_up(V, 128))
    Vp = _round_up(V, tn_eff)

    w1 = jnp.asarray(params["dense_w"], matmul_dtype)            # (H, H)
    b1 = jnp.asarray(params["dense_b"], jnp.float32).reshape(1, H)
    gamma = jnp.asarray(params["ln_gamma"], jnp.float32).reshape(1, H)
    beta = jnp.asarray(params["ln_beta"], jnp.float32).reshape(1, H)
    w2 = jnp.asarray(params["decoder_w"], matmul_dtype)          # (H, Vp)
    b2 = jnp.asarray(params["decoder_b"], jnp.float32).reshape(1, V)
    if Vp != V:
        w2 = jnp.pad(w2, ((0, 0), (0, Vp - V)))
        b2 = jnp.pad(b2, ((0, 0), (0, Vp - V)))

    vmem_cap = _vmem_cap_bytes()

    def forward(sequence_output):
        return _mlm_head_fwd(sequence_output, w1, b1, gamma, beta, w2, b2,
                             tm=tm, tn=tn, vocab=V,
                             logits_dtype=logits_dtype, vmem_cap=vmem_cap)

    return forward


# --------------------------------------------------------------------------
# parameters / reference
# --------------------------------------------------------------------------
def init_params(key, hidden_dim, vocab_size):
    k1, k2, k3 = jax.random.split(key, 3)
    scale = 1.0 / math.sqrt(hidden_dim)
    return {
        "dense_w": jax.random.normal(k1, (hidden_dim, hidden_dim), jnp.float32) * scale,
        "dense_b": jax.random.normal(k2, (hidden_dim,), jnp.float32) * 0.02,
        "ln_gamma": jnp.ones((hidden_dim,), jnp.float32),
        "ln_beta": jnp.zeros((hidden_dim,), jnp.float32),
        "decoder_w": jax.random.normal(k3, (hidden_dim, vocab_size), jnp.float32) * scale,
        "decoder_b": jnp.zeros((vocab_size,), jnp.float32),  # self.bias (zeros)
    }


def _reference(x, p):
    h = x @ p["dense_w"] + p["dense_b"]
    h = 0.5 * h * (1.0 + lax.erf(h * INV_SQRT2))
    mu = jnp.mean(h, axis=-1, keepdims=True)
    var = jnp.mean((h - mu) ** 2, axis=-1, keepdims=True)
    h = (h - mu) / jnp.sqrt(var + LN_EPS)
    h = h * p["ln_gamma"] + p["ln_beta"]
    return h @ p["decoder_w"] + p["decoder_b"]


if __name__ == "__main__":
    # Small shapes; V deliberately NOT a multiple of 128 and M not a multiple
    # of the row tile, to exercise the padding paths used for real BERT sizes.
    B, S, H, V = 2, 10, 128, 500

    key = jax.random.PRNGKey(0)
    k_x, k_p = jax.random.split(key)
    sequence_output = jax.random.normal(k_x, (B, S, H), jnp.float32)
    params = init_params(k_p, H, V)

    ref = _reference(sequence_output, params)

    # Full-precision path: tight check of the kernel structure / math.
    head_f32 = make_bert_mlm_head(params, matmul_dtype=jnp.float32,
                                  logits_dtype=jnp.float32)
    scores_f32 = jax.block_until_ready(head_f32(sequence_output))
    assert scores_f32.shape == (B, S, V)
    assert jnp.allclose(scores_f32, ref, atol=1e-4, rtol=1e-4), \
        "f32 kernel mismatch vs reference"

    # Default optimized path: bf16 matmul inputs on both passes, f32
    # accumulation, f32 logits -> loose tolerance.
    head = make_bert_mlm_head(params)
    scores = jax.block_until_ready(head(sequence_output))
    assert scores.shape == (B, S, V)
    assert scores.dtype == jnp.float32
    assert jnp.allclose(scores, ref, atol=5e-2, rtol=5e-2), \
        "bf16 kernel mismatch vs reference"

    # bf16 logits writeback (halves the dominant pass-2 HBM writeback at real
    # BERT vocab sizes; adds one more half-precision rounding to the logits).
    head_bf16_out = make_bert_mlm_head(params, logits_dtype=jnp.bfloat16)
    scores_bf16 = jax.block_until_ready(head_bf16_out(sequence_output))
    assert scores_bf16.shape == (B, S, V)
    assert scores_bf16.dtype == jnp.bfloat16
    assert jnp.allclose(scores_bf16.astype(jnp.float32), ref,
                        atol=8e-2, rtol=8e-2), \
        "bf16-logits kernel mismatch vs reference"

    print("KERNEL_OK")
</pallas_src>

<mosaic_0001>
module attributes {stable_mosaic.version = 11 : i64} {
  func.func @_transform_kernel(%arg0: i32, %arg1: memref<24x128xf32, #tpu.memory_space<vmem>>, %arg2: memref<128x128xf32, #tpu.memory_space<vmem>>, %arg3: memref<1x128xf32, #tpu.memory_space<vmem>>, %arg4: memref<1x128xf32, #tpu.memory_space<vmem>>, %arg5: memref<1x128xf32, #tpu.memory_space<vmem>>, %arg6: memref<24x128xf32, #tpu.memory_space<vmem>>) attributes {dimension_semantics = [#tpu.dimension_semantics<parallel>], iteration_bounds = array<i64: 1>, scalar_prefetch = 0 : i64, scratch_operands = 0 : i64, tpu.core_type = #tpu.core_type<tc>, window_params = [{transform_indices = @transform_0, window_bounds = array<i64: 24, 128>}, {pipeline_mode = #tpu.pipeline_mode<synchronous>, transform_indices = @transform_1, window_bounds = array<i64: 128, 128>}, {pipeline_mode = #tpu.pipeline_mode<synchronous>, transform_indices = @transform_2, window_bounds = array<i64: 1, 128>}, {pipeline_mode = #tpu.pipeline_mode<synchronous>, transform_indices = @transform_3, window_bounds = array<i64: 1, 128>}, {pipeline_mode = #tpu.pipeline_mode<synchronous>, transform_indices = @transform_4, window_bounds = array<i64: 1, 128>}, {transform_indices = @transform_5, window_bounds = array<i64: 24, 128>}]} {
    %c0 = arith.constant 0 : index
    %c0_0 = arith.constant 0 : index
    %0 = vector.load %arg1[%c0, %c0_0] : memref<24x128xf32, #tpu.memory_space<vmem>>, vector<24x128xf32>
    %c0_1 = arith.constant 0 : index
    %c0_2 = arith.constant 0 : index
    %1 = vector.load %arg2[%c0_1, %c0_2] : memref<128x128xf32, #tpu.memory_space<vmem>>, vector<128x128xf32>
    %cst = arith.constant dense<0.000000e+00> : vector<24x128xf32>
    %2 = tpu.matmul %0, %1, %cst {dimension_numbers = #tpu.dot_dimension_numbers<[1], [0], [0], [1], [0, 0, 1, 1], [], []>} : vector<24x128xf32>, vector<128x128xf32>, vector<24x128xf32> -> vector<24x128xf32>
    %c0_3 = arith.constant 0 : index
    %c0_4 = arith.constant 0 : index
    %3 = vector.load %arg3[%c0_3, %c0_4] : memref<1x128xf32, #tpu.memory_space<vmem>>, vector<1x128xf32>
    %4 = vector.broadcast %3 : vector<1x128xf32> to vector<24x128xf32>
    %5 = arith.addf %2, %4 : vector<24x128xf32>
    %cst_5 = arith.constant 5.000000e-01 : f32
    %6 = vector.broadcast %cst_5 : f32 to vector<24x128xf32>
    %7 = arith.mulf %6, %5 : vector<24x128xf32>
    %cst_6 = arith.constant 0.707106769 : f32
    %8 = vector.broadcast %cst_6 : f32 to vector<24x128xf32>
    %9 = arith.mulf %5, %8 : vector<24x128xf32>
    %10 = math.erf %9 : vector<24x128xf32>
    %cst_7 = arith.constant 1.000000e+00 : f32
    %11 = vector.broadcast %cst_7 : f32 to vector<24x128xf32>
    %12 = arith.addf %11, %10 : vector<24x128xf32>
    %13 = arith.mulf %7, %12 : vector<24x128xf32>
    %cst_8 = arith.constant dense<0.000000e+00> : vector<24xf32>
    %14 = vector.multi_reduction <add>, %13, %cst_8 [1] : vector<24x128xf32> to vector<24xf32>
    %15 = vector.shape_cast %14 : vector<24xf32> to vector<24x1xf32>
    %cst_9 = arith.constant 1.280000e+02 : f32
    %16 = vector.broadcast %cst_9 : f32 to vector<24x1xf32>
    %17 = arith.divf %15, %16 : vector<24x1xf32>
    %18 = vector.broadcast %17 : vector<24x1xf32> to vector<24x128xf32>
    %19 = arith.subf %13, %18 : vector<24x128xf32>
    %20 = vector.broadcast %17 : vector<24x1xf32> to vector<24x128xf32>
    %21 = arith.subf %13, %20 : vector<24x128xf32>
    %22 = arith.mulf %19, %21 : vector<24x128xf32>
    %cst_10 = arith.constant dense<0.000000e+00> : vector<24xf32>
    %23 = vector.multi_reduction <add>, %22, %cst_10 [1] : vector<24x128xf32> to vector<24xf32>
    %24 = vector.shape_cast %23 : vector<24xf32> to vector<24x1xf32>
    %cst_11 = arith.constant 1.280000e+02 : f32
    %25 = vector.broadcast %cst_11 : f32 to vector<24x1xf32>
    %26 = arith.divf %24, %25 : vector<24x1xf32>
    %27 = vector.broadcast %17 : vector<24x1xf32> to vector<24x128xf32>
    %28 = arith.subf %13, %27 : vector<24x128xf32>
    %cst_12 = arith.constant 9.99999996E-13 : f32
    %29 = vector.broadcast %cst_12 : f32 to vector<24x1xf32>
    %30 = arith.addf %26, %29 : vector<24x1xf32>
    %31 = math.rsqrt %30 : vector<24x1xf32>
    %32 = vector.broadcast %31 : vector<24x1xf32> to vector<24x128xf32>
    %33 = arith.mulf %28, %32 : vector<24x128xf32>
    %c0_13 = arith.constant 0 : index
    %c0_14 = arith.constant 0 : index
    %34 = vector.load %arg4[%c0_13, %c0_14] : memref<1x128xf32, #tpu.memory_space<vmem>>, vector<1x128xf32>
    %35 = vector.broadcast %34 : vector<1x128xf32> to vector<24x128xf32>
    %36 = arith.mulf %33, %35 : vector<24x128xf32>
    %c0_15 = arith.constant 0 : index
    %c0_16 = arith.constant 0 : index
    %37 = vector.load %arg5[%c0_15, %c0_16] : memref<1x128xf32, #tpu.memory_space<vmem>>, vector<1x128xf32>
    %38 = vector.broadcast %37 : vector<1x128xf32> to vector<24x128xf32>
    %39 = arith.addf %36, %38 : vector<24x128xf32>
    %c0_17 = arith.constant 0 : index
    %c0_18 = arith.constant 0 : index
    %40 = vector.load %arg6[%c0_17, %c0_18] : memref<24x128xf32, #tpu.memory_space<vmem>>, vector<24x128xf32>
    tpu.vector_store %arg6[%c0_17, %c0_18], %39 {strides = array<i32>} : memref<24x128xf32, #tpu.memory_space<vmem>>, vector<24x128xf32>,
    return
  }
  func.func @transform_0(%arg0: i32) -> (i32, i32) {
    %c0_i32 = arith.constant 0 : i32
    %c0_i32_0 = arith.constant 0 : i32
    return %arg0, %c0_i32 : i32, i32
  }
  func.func @transform_1(%arg0: i32) -> (i32, i32) {
    %c0_i32 = arith.constant 0 : i32
    %c0_i32_0 = arith.constant 0 : i32
    %c0_i32_1 = arith.constant 0 : i32
    return %c0_i32, %c0_i32_0 : i32, i32
  }
  func.func @transform_2(%arg0: i32) -> (i32, i32) {
    %c0_i32 = arith.constant 0 : i32
    %c0_i32_0 = arith.constant 0 : i32
    %c0_i32_1 = arith.constant 0 : i32
    return %c0_i32, %c0_i32_0 : i32, i32
  }
  func.func @transform_3(%arg0: i32) -> (i32, i32) {
    %c0_i32 = arith.constant 0 : i32
    %c0_i32_0 = arith.constant 0 : i32
    %c0_i32_1 = arith.constant 0 : i32
    return %c0_i32, %c0_i32_0 : i32, i32
  }
  func.func @transform_4(%arg0: i32) -> (i32, i32) {
    %c0_i32 = arith.constant 0 : i32
    %c0_i32_0 = arith.constant 0 : i32
    %c0_i32_1 = arith.constant 0 : i32
    return %c0_i32, %c0_i32_0 : i32, i32
  }
  func.func @transform_5(%arg0: i32) -> (i32, i32) {
    %c0_i32 = arith.constant 0 : i32
    %c0_i32_0 = arith.constant 0 : i32
    return %arg0, %c0_i32 : i32, i32
  }
}

module attributes {stable_mosaic.version = 11 : i64} {
  func.func @_decoder_kernel(%arg0: i32, %arg1: i32, %arg2: memref<24x128xf32, #tpu.memory_space<vmem>>, %arg3: memref<128x512xf32, #tpu.memory_space<vmem>>, %arg4: memref<1x512xf32, #tpu.memory_space<vmem>>, %arg5: memref<24x512xf32, #tpu.memory_space<vmem>>) attributes {dimension_semantics = [#tpu.dimension_semantics<parallel>, #tpu.dimension_semantics<parallel>], iteration_bounds = array<i64: 1, 1>, scalar_prefetch = 0 : i64, scratch_operands = 0 : i64, tpu.core_type = #tpu.core_type<tc>, window_params = [{transform_indices = @transform_0, window_bounds = array<i64: 24, 128>}, {transform_indices = @transform_1, window_bounds = array<i64: 128, 512>}, {transform_indices = @transform_2, window_bounds = array<i64: 1, 512>}, {transform_indices = @transform_3, window_bounds = array<i64: 24, 512>}]} {
    %c0 = arith.constant 0 : index
    %c0_0 = arith.constant 0 : index
    %0 = vector.load %arg2[%c0, %c0_0] : memref<24x128xf32, #tpu.memory_space<vmem>>, vector<24x128xf32>
    %c0_1 = arith.constant 0 : index
    %c0_2 = arith.constant 0 : index
    %1 = vector.load %arg3[%c0_1, %c0_2] : memref<128x512xf32, #tpu.memory_space<vmem>>, vector<128x512xf32>
    %cst = arith.constant dense<0.000000e+00> : vector<24x512xf32>
    %2 = tpu.matmul %0, %1, %cst {dimension_numbers = #tpu.dot_dimension_numbers<[1], [0], [0], [1], [0, 0, 1, 1], [], []>} : vector<24x128xf32>, vector<128x512xf32>, vector<24x512xf32> -> vector<24x512xf32>
    %c0_3 = arith.constant 0 : index
    %c0_4 = arith.constant 0 : index
    %3 = vector.load %arg4[%c0_3, %c0_4] : memref<1x512xf32, #tpu.memory_space<vmem>>, vector<1x512xf32>
    %4 = vector.broadcast %3 : vector<1x512xf32> to vector<24x512xf32>
    %5 = arith.addf %2, %4 : vector<24x512xf32>
    %c0_5 = arith.constant 0 : index
    %c0_6 = arith.constant 0 : index
    %6 = vector.load %arg5[%c0_5, %c0_6] : memref<24x512xf32, #tpu.memory_space<vmem>>, vector<24x512xf32>
    tpu.vector_store %arg5[%c0_5, %c0_6], %5 {strides = array<i32>} : memref<24x512xf32, #tpu.memory_space<vmem>>, vector<24x512xf32>,
    return
  }
  func.func @transform_0(%arg0: i32, %arg1: i32) -> (i32, i32) {
    %c0_i32 = arith.constant 0 : i32
    %c0_i32_0 = arith.constant 0 : i32
    return %arg0, %c0_i32 : i32, i32
  }
  func.func @transform_1(%arg0: i32, %arg1: i32) -> (i32, i32) {
    %c0_i32 = arith.constant 0 : i32
    %c0_i32_0 = arith.constant 0 : i32
    return %c0_i32, %arg1 : i32, i32
  }
  func.func @transform_2(%arg0: i32, %arg1: i32) -> (i32, i32) {
    %c0_i32 = arith.constant 0 : i32
    %c0_i32_0 = arith.constant 0 : i32
    return %c0_i32, %arg1 : i32, i32
  }
  func.func @transform_3(%arg0: i32, %arg1: i32) -> (i32, i32) {
    %c0_i32 = arith.constant 0 : i32
    return %arg0, %arg1 : i32, i32
  }
}

</mosaic_0001>

<llo_original>
// kernel: _mlm_head_fwd.3
$region0: #{_mlm_head_fwd.3}
  #allocation0 [shape = 'u32[]', space=smem, size = 0x4, offset = 0x4, fixed_abs, tag = 'smem constant byte address 0x4 - core index']
  #allocation1 [shape = 'u32[144,128]{1,0:T(1,128)}', space=vmem, size = 0x12000, scoped, tag = 'internal scratch']
  %s0 = inlined_call_operand.vmem [shape: f32[24,128], index: 0, kind: input, shape index: {}]
  %s1 = inlined_call_operand.hbm [shape: f32[128,512], index: 1, kind: input, shape index: {}]
  %s2 = inlined_call_operand.vmem [shape: f32[1,512], index: 2, kind: input, shape index: {}]
  %s3 = inlined_call_operand.vmem [shape: f32[24,512], index: 3, kind: output, shape index: {}]
  %s4 = sld [smem:[#allocation0]]
  $region26: #{_mlm_head_fwd.3} parent=0
    _
  %s6 = ssub.s32 1, %s4
  %s7 = scalar_select 0, %s6, %s4
  $region1: #{_mlm_head_fwd.3} parent=0
    #allocation2 [shape = 'u8[262144]{0}', space=vmem, size = 0x40000, scoped, tag = 'input window, operand 1, single buffered']
    #allocation3 [shape = 's32[1]{0}', space=sflag, size = 0x4, scoped, tag = 'scoped memory for _mlm_head_fwd.3']
    %8 = vsyncpa [#allocation3], 0
    // Predicated region
    $region2: #{_mlm_head_fwd.3} parent=1 // pred_check
      _
    $region3: #{_mlm_head_fwd.3} parent=1 // pred_check_branch
      %10 = sbr.rel (0) target = $region5
    $region4: #{_mlm_head_fwd.3} parent=1 // pred_region
      _
    $region5: #{_mlm_head_fwd.3} parent=1 // pred_fallthru
      _
    // Predicated region
    $region6: #{_mlm_head_fwd.3} parent=1 // pred_check
      _
    $region7: #{_mlm_head_fwd.3} parent=1 // pred_check_branch
      %12 = sbr.rel (0) target = $region9
    $region8: #{_mlm_head_fwd.3} parent=1 // pred_region
      %s14 = ssub.s32 8192, 8192
      %15 = vsyncadd [#allocation3], %s14
      %s16 = sshll.u32 [#allocation2], 4
      %s17 = int_to_ptr.vmem [resolvable:$true] %s16
      %22 = dma.hbm_to_vmem [thread:$0]  %s1, 8192, %s17, [#allocation3], 512, 512, 32
    $region9: #{_mlm_head_fwd.3} parent=1 // pred_fallthru
      _
    // Predicated region
    $region10: #{_mlm_head_fwd.3} parent=1 // pred_check
      _
    $region11: #{_mlm_head_fwd.3} parent=1 // pred_check_branch
      %24 = sbr.rel (0) target = $region13
    $region12: #{_mlm_head_fwd.3} parent=1 // pred_region
      _
    $region13: #{_mlm_head_fwd.3} parent=1 // pred_fallthru
      _
    // Predicated region
    $region14: #{_mlm_head_fwd.3} parent=1 // pred_check
      _
    $region15: #{_mlm_head_fwd.3} parent=1 // pred_check_branch
      %26 = sbr.rel (0) target = $region17
    $region16: #{_mlm_head_fwd.3} parent=1 // pred_region
      %27 = dma.done [#allocation3], 8192
    $region17: #{_mlm_head_fwd.3} parent=1 // pred_fallthru
      _
    %v28 = vld [vmem:[%s0] sm:$0xff]
    %v29 = vld [vmem:[%s0 + $0x8] sm:$0xff]
    %v30 = vld [vmem:[%s0 + $0x10] sm:$0xff]
    %v31 = vld [vmem:[#allocation2] sm:$0xff]
    %v32 = vld [vmem:[#allocation2 + $0x8] sm:$0xff]
    %v33 = vld [vmem:[#allocation2 + $0x10] sm:$0xff]
    %v34 = vld [vmem:[#allocation2 + $0x18] sm:$0xff]
    %v35 = vld [vmem:[#allocation2 + $0x20] sm:$0xff]
    %v36 = vld [vmem:[#allocation2 + $0x28] sm:$0xff]
    %v37 = vld [vmem:[#allocation2 + $0x30] sm:$0xff]
    %v38 = vld [vmem:[#allocation2 + $0x38] sm:$0xff]
    %v39 = vld [vmem:[#allocation2 + $0x40] sm:$0xff]
    %v40 = vld [vmem:[#allocation2 + $0x48] sm:$0xff]
    %v41 = vld [vmem:[#allocation2 + $0x50] sm:$0xff]
    %v42 = vld [vmem:[#allocation2 + $0x58] sm:$0xff]
    %v43 = vld [vmem:[#allocation2 + $0x60] sm:$0xff]
    %v44 = vld [vmem:[#allocation2 + $0x68] sm:$0xff]
    %v45 = vld [vmem:[#allocation2 + $0x70] sm:$0xff]
    %v46 = vld [vmem:[#allocation2 + $0x78] sm:$0xff]
    %v47 = vld [vmem:[#allocation2 + $0x80] sm:$0xff]
    %v48 = vld [vmem:[#allocation2 + $0x88] sm:$0xff]
    %v49 = vld [vmem:[#allocation2 + $0x90] sm:$0xff]
    %v50 = vld [vmem:[#allocation2 + $0x98] sm:$0xff]
    %v51 = vld [vmem:[#allocation2 + $0xa0] sm:$0xff]
    %v52 = vld [vmem:[#allocation2 + $0xa8] sm:$0xff]
    %v53 = vld [vmem:[#allocation2 + $0xb0] sm:$0xff]
    %v54 = vld [vmem:[#allocation2 + $0xb8] sm:$0xff]
    %v55 = vld [vmem:[#allocation2 + $0xc0] sm:$0xff]
    %v56 = vld [vmem:[#allocation2 + $0xc8] sm:$0xff]
    %v57 = vld [vmem:[#allocation2 + $0xd0] sm:$0xff]
    %v58 = vld [vmem:[#allocation2 + $0xd8] sm:$0xff]
    %v59 = vld [vmem:[#allocation2 + $0xe0] sm:$0xff]
    %v60 = vld [vmem:[#allocation2 + $0xe8] sm:$0xff]
    %v61 = vld [vmem:[#allocation2 + $0xf0] sm:$0xff]
    %v62 = vld [vmem:[#allocation2 + $0xf8] sm:$0xff]
    %v63 = vld [vmem:[#allocation2 + $0x100] sm:$0xff]
    %v64 = vld [vmem:[#allocation2 + $0x108] sm:$0xff]
    %v65 = vld [vmem:[#allocation2 + $0x110] sm:$0xff]
    %v66 = vld [vmem:[#allocation2 + $0x118] sm:$0xff]
    %v67 = vld [vmem:[#allocation2 + $0x120] sm:$0xff]
    %v68 = vld [vmem:[#allocation2 + $0x128] sm:$0xff]
    %v69 = vld [vmem:[#allocation2 + $0x130] sm:$0xff]
    %v70 = vld [vmem:[#allocation2 + $0x138] sm:$0xff]
    %v71 = vld [vmem:[#allocation2 + $0x140] sm:$0xff]
    %v72 = vld [vmem:[#allocation2 + $0x148] sm:$0xff]
    %v73 = vld [vmem:[#allocation2 + $0x150] sm:$0xff]
    %v74 = vld [vmem:[#allocation2 + $0x158] sm:$0xff]
    %v75 = vld [vmem:[#allocation2 + $0x160] sm:$0xff]
    %v76 = vld [vmem:[#allocation2 + $0x168] sm:$0xff]
    %v77 = vld [vmem:[#allocation2 + $0x170] sm:$0xff]
    %v78 = vld [vmem:[#allocation2 + $0x178] sm:$0xff]
    %v79 = vld [vmem:[#allocation2 + $0x180] sm:$0xff]
    %v80 = vld [vmem:[#allocation2 + $0x188] sm:$0xff]
    %v81 = vld [vmem:[#allocation2 + $0x190] sm:$0xff]
    %v82 = vld [vmem:[#allocation2 + $0x198] sm:$0xff]
    %v83 = vld [vmem:[#allocation2 + $0x1a0] sm:$0xff]
    %v84 = vld [vmem:[#allocation2 + $0x1a8] sm:$0xff]
    %v85 = vld [vmem:[#allocation2 + $0x1b0] sm:$0xff]
    %v86 = vld [vmem:[#allocation2 + $0x1b8] sm:$0xff]
    %v87 = vld [vmem:[#allocation2 + $0x1c0] sm:$0xff]
    %v88 = vld [vmem:[#allocation2 + $0x1c8] sm:$0xff]
    %v89 = vld [vmem:[#allocation2 + $0x1d0] sm:$0xff]
    %v90 = vld [vmem:[#allocation2 + $0x1d8] sm:$0xff]
    %v91 = vld [vmem:[#allocation2 + $0x1e0] sm:$0xff]
    %v92 = vld [vmem:[#allocation2 + $0x1e8] sm:$0xff]
    %v93 = vld [vmem:[#allocation2 + $0x1f0] sm:$0xff]
    %v94 = vld [vmem:[#allocation2 + $0x1f8] sm:$0xff]
    %v95 = vld [vmem:[%s2] sm:$0xf]
    %v97 = vlaneseq
    %v98 = vshrl.u32 %v97, 7
    %v99 = vsub.s32 0, %v98
    %v100 = vrot.slane %v95, %v99
    %v101 = vlaneseq
    %v102 = vshrl.u32 %v101, 7
    %v103 = vsub.s32 1, %v102
    %v104 = vrot.slane %v95, %v103
    %v105 = vlaneseq
    %v106 = vshrl.u32 %v105, 7
    %v107 = vsub.s32 2, %v106
    %v108 = vrot.slane %v95, %v107
    %v109 = vlaneseq
    %v110 = vshrl.u32 %v109, 7
    %v111 = vsub.s32 3, %v110
    %v112 = vrot.slane %v95, %v111
    %117 = vmatprep.subr.mxu0 %v32
    %118 = vmatpush1.msra.mxu0 %v31
    %119 = vmatprep.subr.mxu0 %v36
    %120 = vmatpush1.msra.mxu0 %v35
    %121 = vmatprep.subr.mxu0 %v40
    %122 = vmatpush1.msra.mxu0 %v39
    %123 = vmatprep.subr.mxu0 %v44
    %124 = vmatpush1.msra.mxu0 %v43
    %125 = vmatprep.subr.mxu0 %v48
    %126 = vmatpush1.msra.mxu0 %v47
    %127 = vmatprep.subr.mxu0 %v52
    %128 = vmatpush1.msra.mxu0 %v51
    %129 = vmatprep.subr.mxu0 %v56
    %130 = vmatpush1.msra.mxu0 %v55
    %131 = vmatprep.subr.mxu0 %v60
    %132 = vmatpush1.msra.mxu0 %v59
    %133 = vmatprep.subr.mxu0 %v64
    %134 = vmatpush1.msra.mxu0 %v63
    %135 = vmatprep.subr.mxu0 %v68
    %136 = vmatpush1.msra.mxu0 %v67
    %137 = vmatprep.subr.mxu0 %v72
    %138 = vmatpush1.msra.mxu0 %v71
    %139 = vmatprep.subr.mxu0 %v76
    %140 = vmatpush1.msra.mxu0 %v75
    %141 = vmatprep.subr.mxu0 %v80
    %142 = vmatpush1.msra.mxu0 %v79
    %143 = vmatprep.subr.mxu0 %v84
    %144 = vmatpush1.msra.mxu0 %v83
    %145 = vmatprep.subr.mxu0 %v88
    %146 = vmatpush1.msra.mxu0 %v87
    %147 = vmatprep.subr.mxu0 %v92
    %148 = vmatpush1.msra.mxu0 %v91
    %149 = vmatprep.subr.mxu0 0.0
    %150 = vmatpush1.msra.mxu0 0.0
    %151 = vmatprep.subr.mxu0 0.0
    %152 = vmatpush1.msra.mxu0 0.0
    %153 = vmatprep.subr.mxu0 0.0
    %154 = vmatpush1.msra.mxu0 0.0
    %155 = vmatprep.subr.mxu0 0.0
    %156 = vmatpush1.msra.mxu0 0.0
    %157 = vmatprep.subr.mxu0 0.0
    %158 = vmatpush1.msra.mxu0 0.0
    %159 = vmatprep.subr.mxu0 0.0
    %160 = vmatpush1.msra.mxu0 0.0
    %161 = vmatprep.subr.mxu0 0.0
    %162 = vmatpush1.msra.mxu0 0.0
    %163 = vmatprep.subr.mxu0 0.0
    %164 = vmatpush1.msra.mxu0 0.0
    %165 = vmatprep.subr.mxu0 0.0
    %166 = vmatpush1.msra.mxu0 0.0
    %167 = vmatprep.subr.mxu0 0.0
    %168 = vmatpush1.msra.mxu0 0.0
    %169 = vmatprep.subr.mxu0 0.0
    %170 = vmatpush1.msra.mxu0 0.0
    %171 = vmatprep.subr.mxu0 0.0
    %172 = vmatpush1.msra.mxu0 0.0
    %173 = vmatprep.subr.mxu0 0.0
    %174 = vmatpush1.msra.mxu0 0.0
    %175 = vmatprep.subr.mxu0 0.0
    %176 = vmatpush1.msra.mxu0 0.0
    %177 = vmatprep.subr.mxu0 0.0
    %178 = vmatpush1.msra.mxu0 0.0
    %179 = vmatprep.subr.mxu0 0.0
    %180 = vmatpush1.msra.mxu0 0.0
    %181 = vmatprep.mubr.f32.mxu0 0.0
    %182 = vmatmul.mubr.f32.gmra.mrb[0].mxu0 %v28
    %v183 = vpop.f32.mrb[0].mxu0
    %v184 = vadd.f32 %v100, %v183
    %v185 = vpop.f32.mrb[0].mxu0
    %v186 = vadd.f32 %v104, %v185
    %187 = vmatprep.mubr.f32.mxu0 0.0
    %188 = vmatmul.mubr.f32.gmra.mrb[0].mxu0 %v29
    %v189 = vpop.f32.mrb[0].mxu0
    %v190 = vadd.f32 %v100, %v189
    %v191 = vpop.f32.mrb[0].mxu0
    %v192 = vadd.f32 %v104, %v191
    %193 = vmatprep.mubr.f32.mxu0 0.0
    %194 = vmatmul.mubr.f32.gmra.mrb[0].mxu0 %v30
    %v195 = vpop.f32.mrb[0].mxu0
    %v196 = vadd.f32 %v100, %v195
    %v197 = vpop.f32.mrb[0].mxu0
    %v198 = vadd.f32 %v104, %v197
    %199 = vdwg.mxu0
    %200 = vmatprep.subr.mxu0 %v34
    %201 = vmatpush1.msra.mxu0 %v33
    %202 = vmatprep.subr.mxu0 %v38
    %203 = vmatpush1.msra.mxu0 %v37
    %204 = vmatprep.subr.mxu0 %v42
    %205 = vmatpush1.msra.mxu0 %v41
    %206 = vmatprep.subr.mxu0 %v46
    %207 = vmatpush1.msra.mxu0 %v45
    %208 = vmatprep.subr.mxu0 %v50
    %209 = vmatpush1.msra.mxu0 %v49
    %210 = vmatprep.subr.mxu0 %v54
    %211 = vmatpush1.msra.mxu0 %v53
    %212 = vmatprep.subr.mxu0 %v58
    %213 = vmatpush1.msra.mxu0 %v57
    %214 = vmatprep.subr.mxu0 %v62
    %215 = vmatpush1.msra.mxu0 %v61
    %216 = vmatprep.subr.mxu0 %v66
    %217 = vmatpush1.msra.mxu0 %v65
    %218 = vmatprep.subr.mxu0 %v70
    %219 = vmatpush1.msra.mxu0 %v69
    %220 = vmatprep.subr.mxu0 %v74
    %221 = vmatpush1.msra.mxu0 %v73
    %222 = vmatprep.subr.mxu0 %v78
    %223 = vmatpush1.msra.mxu0 %v77
    %224 = vmatprep.subr.mxu0 %v82
    %225 = vmatpush1.msra.mxu0 %v81
    %226 = vmatprep.subr.mxu0 %v86
    %227 = vmatpush1.msra.mxu0 %v85
    %228 = vmatprep.subr.mxu0 %v90
    %229 = vmatpush1.msra.mxu0 %v89
    %230 = vmatprep.subr.mxu0 %v94
    %231 = vmatpush1.msra.mxu0 %v93
    %232 = vmatprep.subr.mxu0 0.0
    %233 = vmatpush1.msra.mxu0 0.0
    %234 = vmatprep.subr.mxu0 0.0
    %235 = vmatpush1.msra.mxu0 0.0
    %236 = vmatprep.subr.mxu0 0.0
    %237 = vmatpush1.msra.mxu0 0.0
    %238 = vmatprep.subr.mxu0 0.0
    %239 = vmatpush1.msra.mxu0 0.0
    %240 = vmatprep.subr.mxu0 0.0
    %241 = vmatpush1.msra.mxu0 0.0
    %242 = vmatprep.subr.mxu0 0.0
    %243 = vmatpush1.msra.mxu0 0.0
    %244 = vmatprep.subr.mxu0 0.0
    %245 = vmatpush1.msra.mxu0 0.0
    %246 = vmatprep.subr.mxu0 0.0
    %247 = vmatpush1.msra.mxu0 0.0
    %248 = vmatprep.subr.mxu0 0.0
    %249 = vmatpush1.msra.mxu0 0.0
    %250 = vmatprep.subr.mxu0 0.0
    %251 = vmatpush1.msra.mxu0 0.0
    %252 = vmatprep.subr.mxu0 0.0
    %253 = vmatpush1.msra.mxu0 0.0
    %254 = vmatprep.subr.mxu0 0.0
    %255 = vmatpush1.msra.mxu0 0.0
    %256 = vmatprep.subr.mxu0 0.0
    %257 = vmatpush1.msra.mxu0 0.0
    %258 = vmatprep.subr.mxu0 0.0
    %259 = vmatpush1.msra.mxu0 0.0
    %260 = vmatprep.subr.mxu0 0.0
    %261 = vmatpush1.msra.mxu0 0.0
    %262 = vmatprep.subr.mxu0 0.0
    %263 = vmatpush1.msra.mxu0 0.0
    %264 = vmatprep.mubr.f32.mxu0 0.0
    %265 = vmatmul.mubr.f32.gmra.mrb[0].mxu0 %v28
    %v266 = vpop.f32.mrb[0].mxu0
    %v267 = vadd.f32 %v108, %v266
    %v268 = vpop.f32.mrb[0].mxu0
    %v269 = vadd.f32 %v112, %v268
    %270 = vmatprep.mubr.f32.mxu0 0.0
    %271 = vmatmul.mubr.f32.gmra.mrb[0].mxu0 %v29
    %v272 = vpop.f32.mrb[0].mxu0
    %v273 = vadd.f32 %v108, %v272
    %v274 = vpop.f32.mrb[0].mxu0
    %v275 = vadd.f32 %v112, %v274
    %276 = vmatprep.mubr.f32.mxu0 0.0
    %277 = vmatmul.mubr.f32.gmra.mrb[0].mxu0 %v30
    %v278 = vpop.f32.mrb[0].mxu0
    %v279 = vadd.f32 %v108, %v278
    %v280 = vpop.f32.mrb[0].mxu0
    %v281 = vadd.f32 %v112, %v280
    %282 = vdwg.mxu0
    %283 = vst [vmem:[%s3] sm:$0xff] %v184
    %284 = vst [vmem:[%s3 + $0x8] sm:$0xff] %v186
    %285 = vst [vmem:[%s3 + $0x10] sm:$0xff] %v267
    %286 = vst [vmem:[%s3 + $0x18] sm:$0xff] %v269
    %287 = vst [vmem:[%s3 + $0x20] sm:$0xff] %v190
    %288 = vst [vmem:[%s3 + $0x28] sm:$0xff] %v192
    %289 = vst [vmem:[%s3 + $0x30] sm:$0xff] %v273
    %290 = vst [vmem:[%s3 + $0x38] sm:$0xff] %v275
    %291 = vst [vmem:[%s3 + $0x40] sm:$0xff] %v196
    %292 = vst [vmem:[%s3 + $0x48] sm:$0xff] %v198
    %293 = vst [vmem:[%s3 + $0x50] sm:$0xff] %v279
    %294 = vst [vmem:[%s3 + $0x58] sm:$0xff] %v281
    // Predicated region
    $region18: #{_mlm_head_fwd.3} parent=1 // pred_check
      _
    $region19: #{_mlm_head_fwd.3} parent=1 // pred_check_branch
      %296 = sbr.rel (0) target = $region21
    $region20: #{_mlm_head_fwd.3} parent=1 // pred_region
      _
    $region21: #{_mlm_head_fwd.3} parent=1 // pred_fallthru
      _
    // Predicated region
    $region22: #{_mlm_head_fwd.3} parent=1 // pred_check
      _
    $region23: #{_mlm_head_fwd.3} parent=1 // pred_check_branch
      %298 = sbr.rel (0) target = $region25
    $region24: #{_mlm_head_fwd.3} parent=1 // pred_region
      _
    $region25: #{_mlm_head_fwd.3} parent=1 // pred_fallthru
      _
    %299 = vsyncpa [#allocation3], 1

// kernel: _mlm_head_fwd.2
$region0: #{_mlm_head_fwd.2}
  #allocation0 [shape = 'u32[]', space=smem, size = 0x4, offset = 0x4, fixed_abs, tag = 'smem constant byte address 0x4 - core index']
  #allocation1 [shape = 'u32[144,128]{1,0:T(1,128)}', space=vmem, size = 0x12000, scoped, tag = 'internal scratch']
  %s0 = inlined_call_operand.vmem [shape: f32[24,128], index: 0, kind: input, shape index: {}]
  %s1 = inlined_call_operand.vmem [shape: f32[128,128], index: 1, kind: input, shape index: {}]
  %s2 = inlined_call_operand.vmem [shape: f32[1,128], index: 2, kind: input, shape index: {}]
  %s3 = inlined_call_operand.vmem [shape: f32[1,128], index: 3, kind: input, shape index: {}]
  %s4 = inlined_call_operand.vmem [shape: f32[1,128], index: 4, kind: input, shape index: {}]
  %s5 = inlined_call_operand.vmem [shape: f32[24,128], index: 5, kind: output, shape index: {}]
  %s6 = sld [smem:[#allocation0]]
  $region30: #{_mlm_head_fwd.2} parent=0
    _
  %s8 = ssub.s32 1, %s6
  %s9 = scalar_select 0, %s8, %s6
  // Predicated region
  $region2: #{_mlm_head_fwd.2} parent=0 // pred_check
    _
  $region3: #{_mlm_head_fwd.2} parent=0 // pred_check_branch
    %11 = sbr.rel (0) target = $region5
  $region4: #{_mlm_head_fwd.2} parent=0 // pred_region
    _
  $region5: #{_mlm_head_fwd.2} parent=0 // pred_fallthru
    _
  // Predicated region
  $region6: #{_mlm_head_fwd.2} parent=0 // pred_check
    _
  $region7: #{_mlm_head_fwd.2} parent=0 // pred_check_branch
    %13 = sbr.rel (0) target = $region9
  $region8: #{_mlm_head_fwd.2} parent=0 // pred_region
    _
  $region9: #{_mlm_head_fwd.2} parent=0 // pred_fallthru
    _
  // Predicated region
  $region10: #{_mlm_head_fwd.2} parent=0 // pred_check
    _
  $region11: #{_mlm_head_fwd.2} parent=0 // pred_check_branch
    %15 = sbr.rel (0) target = $region13
  $region12: #{_mlm_head_fwd.2} parent=0 // pred_region
    _
  $region13: #{_mlm_head_fwd.2} parent=0 // pred_fallthru
    _
  // Predicated region
  $region14: #{_mlm_head_fwd.2} parent=0 // pred_check
    _
  $region15: #{_mlm_head_fwd.2} parent=0 // pred_check_branch
    %17 = sbr.rel (0) target = $region17
  $region16: #{_mlm_head_fwd.2} parent=0 // pred_region
    _
  $region17: #{_mlm_head_fwd.2} parent=0 // pred_fallthru
    _
  // Predicated region
  $region18: #{_mlm_head_fwd.2} parent=0 // pred_check
    _
  $region19: #{_mlm_head_fwd.2} parent=0 // pred_check_branch
    %19 = sbr.rel (0) target = $region21
  $region20: #{_mlm_head_fwd.2} parent=0 // pred_region
    _
  $region21: #{_mlm_head_fwd.2} parent=0 // pred_fallthru
    _
  %v20 = vld [vmem:[%s0] sm:$0xff]
  %v21 = vld [vmem:[%s0 + $0x8] sm:$0xff]
  %v22 = vld [vmem:[%s0 + $0x10] sm:$0xff]
  %v23 = vld [vmem:[%s1] sm:$0xff]
  %v24 = vld [vmem:[%s1 + $0x8] sm:$0xff]
  %v25 = vld [vmem:[%s1 + $0x10] sm:$0xff]
  %v26 = vld [vmem:[%s1 + $0x18] sm:$0xff]
  %v27 = vld [vmem:[%s1 + $0x20] sm:$0xff]
  %v28 = vld [vmem:[%s1 + $0x28] sm:$0xff]
  %v29 = vld [vmem:[%s1 + $0x30] sm:$0xff]
  %v30 = vld [vmem:[%s1 + $0x38] sm:$0xff]
  %v31 = vld [vmem:[%s1 + $0x40] sm:$0xff]
  %v32 = vld [vmem:[%s1 + $0x48] sm:$0xff]
  %v33 = vld [vmem:[%s1 + $0x50] sm:$0xff]
  %v34 = vld [vmem:[%s1 + $0x58] sm:$0xff]
  %v35 = vld [vmem:[%s1 + $0x60] sm:$0xff]
  %v36 = vld [vmem:[%s1 + $0x68] sm:$0xff]
  %v37 = vld [vmem:[%s1 + $0x70] sm:$0xff]
  %v38 = vld [vmem:[%s1 + $0x78] sm:$0xff]
  %v39 = vld [vmem:[%s2] sm:$0x1]
  %v41 = vlaneseq
  %v42 = vshrl.u32 %v41, 7
  %v43 = vsub.s32 0, %v42
  %v44 = vrot.slane %v39, %v43
  %46 = vmatprep.subr.mxu0 0.0
  %47 = vmatpush1.msra.mxu0 %v23
  %48 = vmatprep.subr.mxu0 0.0
  %49 = vmatpush1.msra.mxu0 %v24
  %50 = vmatprep.subr.mxu0 0.0
  %51 = vmatpush1.msra.mxu0 %v25
  %52 = vmatprep.subr.mxu0 0.0
  %53 = vmatpush1.msra.mxu0 %v26
  %54 = vmatprep.subr.mxu0 0.0
  %55 = vmatpush1.msra.mxu0 %v27
  %56 = vmatprep.subr.mxu0 0.0
  %57 = vmatpush1.msra.mxu0 %v28
  %58 = vmatprep.subr.mxu0 0.0
  %59 = vmatpush1.msra.mxu0 %v29
  %60 = vmatprep.subr.mxu0 0.0
  %61 = vmatpush1.msra.mxu0 %v30
  %62 = vmatprep.subr.mxu0 0.0
  %63 = vmatpush1.msra.mxu0 %v31
  %64 = vmatprep.subr.mxu0 0.0
  %65 = vmatpush1.msra.mxu0 %v32
  %66 = vmatprep.subr.mxu0 0.0
  %67 = vmatpush1.msra.mxu0 %v33
  %68 = vmatprep.subr.mxu0 0.0
  %69 = vmatpush1.msra.mxu0 %v34
  %70 = vmatprep.subr.mxu0 0.0
  %71 = vmatpush1.msra.mxu0 %v35
  %72 = vmatprep.subr.mxu0 0.0
  %73 = vmatpush1.msra.mxu0 %v36
  %74 = vmatprep.subr.mxu0 0.0
  %75 = vmatpush1.msra.mxu0 %v37
  %76 = vmatprep.subr.mxu0 0.0
  %77 = vmatpush1.msra.mxu0 %v38
  %78 = vmatprep.subr.mxu0 0.0
  %79 = vmatpush1.msra.mxu0 0.0
  %80 = vmatprep.subr.mxu0 0.0
  %81 = vmatpush1.msra.mxu0 0.0
  %82 = vmatprep.subr.mxu0 0.0
  %83 = vmatpush1.msra.mxu0 0.0
  %84 = vmatprep.subr.mxu0 0.0
  %85 = vmatpush1.msra.mxu0 0.0
  %86 = vmatprep.subr.mxu0 0.0
  %87 = vmatpush1.msra.mxu0 0.0
  %88 = vmatprep.subr.mxu0 0.0
  %89 = vmatpush1.msra.mxu0 0.0
  %90 = vmatprep.subr.mxu0 0.0
  %91 = vmatpush1.msra.mxu0 0.0
  %92 = vmatprep.subr.mxu0 0.0
  %93 = vmatpush1.msra.mxu0 0.0
  %94 = vmatprep.subr.mxu0 0.0
  %95 = vmatpush1.msra.mxu0 0.0
  %96 = vmatprep.subr.mxu0 0.0
  %97 = vmatpush1.msra.mxu0 0.0
  %98 = vmatprep.subr.mxu0 0.0
  %99 = vmatpush1.msra.mxu0 0.0
  %100 = vmatprep.subr.mxu0 0.0
  %101 = vmatpush1.msra.mxu0 0.0
  %102 = vmatprep.subr.mxu0 0.0
  %103 = vmatpush1.msra.mxu0 0.0
  %104 = vmatprep.subr.mxu0 0.0
  %105 = vmatpush1.msra.mxu0 0.0
  %106 = vmatprep.subr.mxu0 0.0
  %107 = vmatpush1.msra.mxu0 0.0
  %108 = vmatprep.subr.mxu0 0.0
  %109 = vmatpush1.msra.mxu0 0.0
  %110 = vmatprep.mubr.f32.mxu0 0.0
  %111 = vmatmul.mubr.f32.gmra.mrb[0].mxu0 %v20
  %v112 = vpop.f32.mrb[0].mxu0
  %v113 = vadd.f32 %v44, %v112
  %v114 = vpop.f32.mrb[0].mxu0
  %115 = vmatprep.mubr.f32.mxu0 0.0
  %116 = vmatmul.mubr.f32.gmra.mrb[0].mxu0 %v21
  %v117 = vpop.f32.mrb[0].mxu0
  %v118 = vadd.f32 %v44, %v117
  %v119 = vpop.f32.mrb[0].mxu0
  %120 = vmatprep.mubr.f32.mxu0 0.0
  %121 = vmatmul.mubr.f32.gmra.mrb[0].mxu0 %v22
  %v122 = vpop.f32.mrb[0].mxu0
  %v123 = vadd.f32 %v44, %v122
  %v124 = vpop.f32.mrb[0].mxu0
  %125 = vdwg.mxu0
  %v126 = vmul.f32 %v113, 0.5
  %v127 = vmul.f32 %v118, 0.5
  %v128 = vmul.f32 %v123, 0.5
  %v129 = vmul.f32 %v113, 0.70710677
  %v130 = vmul.f32 %v118, 0.70710677
  %v131 = vmul.f32 %v123, 0.70710677
  %v132 = verf.f32.pop %v129
  %v133 = verf.f32.pop %v130
  %v134 = verf.f32.pop %v131
  %v135 = vadd.f32 %v132, 1.0
  %v136 = vadd.f32 %v133, 1.0
  %v137 = vadd.f32 %v134, 1.0
  %v138 = vmul.f32 %v126, %v135
  %v139 = vmul.f32 %v127, %v136
  %v140 = vmul.f32 %v128, %v137
  %141 = vadd.xlane.f32.xlu0 %v138
  %v142 = vpop.xlane.xlu0 %141
  %143 = vadd.xlane.f32.xlu0 %v139
  %v144 = vpop.xlane.xlu0 %143
  %145 = vadd.xlane.f32.xlu0 %v140
  %v146 = vpop.xlane.xlu0 %145
  %v147 = vrcp.pop 128.0
  %v148 = vmul.f32 %v142, %v147
  %v149 = vmul.f32 %v144, %v147
  %v150 = vmul.f32 %v146, %v147
  %v151 = vsub.f32 %v138, %v148
  %v152 = vsub.f32 %v139, %v149
  %v153 = vsub.f32 %v140, %v150
  %v154 = vmul.f32 %v151, %v151
  %v155 = vmul.f32 %v152, %v152
  %v156 = vmul.f32 %v153, %v153
  %157 = vadd.xlane.f32.xlu0 %v154
  %v158 = vpop.xlane.xlu0 %157
  %159 = vadd.xlane.f32.xlu0 %v155
  %v160 = vpop.xlane.xlu0 %159
  %161 = vadd.xlane.f32.xlu0 %v156
  %v162 = vpop.xlane.xlu0 %161
  %v163 = vmul.f32 %v158, %v147
  %v164 = vmul.f32 %v160, %v147
  %v165 = vmul.f32 %v162, %v147
  %v166 = vadd.f32 %v163, 1e-12
  %v167 = vadd.f32 %v164, 1e-12
  %v168 = vadd.f32 %v165, 1e-12
  %v169 = vrsqrt.pop %v166
  %v170 = vrsqrt.pop %v167
  %v171 = vrsqrt.pop %v168
  %v172 = vmul.f32 %v151, %v169
  %v173 = vmul.f32 %v152, %v170
  %v174 = vmul.f32 %v153, %v171
  %v175 = vld [vmem:[%s3] sm:$0x1]
  %v177 = vlaneseq
  %v178 = vshrl.u32 %v177, 7
  %v179 = vsub.s32 0, %v178
  %v180 = vrot.slane %v175, %v179
  %v182 = vmul.f32 %v172, %v180
  %v183 = vmul.f32 %v173, %v180
  %v184 = vmul.f32 %v174, %v180
  %v185 = vld [vmem:[%s4] sm:$0x1]
  %v187 = vlaneseq
  %v188 = vshrl.u32 %v187, 7
  %v189 = vsub.s32 0, %v188
  %v190 = vrot.slane %v185, %v189
  %v192 = vadd.f32 %v182, %v190
  %v193 = vadd.f32 %v183, %v190
  %v194 = vadd.f32 %v184, %v190
  %195 = vst [vmem:[%s5] sm:$0xff] %v192
  %196 = vst [vmem:[%s5 + $0x8] sm:$0xff] %v193
  %197 = vst [vmem:[%s5 + $0x10] sm:$0xff] %v194
  // Predicated region
  $region22: #{_mlm_head_fwd.2} parent=0 // pred_check
    _
  $region23: #{_mlm_head_fwd.2} parent=0 // pred_check_branch
    %199 = sbr.rel (0) target = $region25
  $region24: #{_mlm_head_fwd.2} parent=0 // pred_region
    _
  $region25: #{_mlm_head_fwd.2} parent=0 // pred_fallthru
    _
  // Predicated region
  $region26: #{_mlm_head_fwd.2} parent=0 // pred_check
    _
  $region27: #{_mlm_head_fwd.2} parent=0 // pred_check_branch
    %201 = sbr.rel (0) target = $region29
  $region28: #{_mlm_head_fwd.2} parent=0 // pred_region
    _
  $region29: #{_mlm_head_fwd.2} parent=0 // pred_fallthru
    _

</llo_original>
